<compile_context>
chip_gen: v7x
topology: tpu7x:2x2x1
jax: 0.10.0
libtpu: 0.0.40
codegen_flags: <defaults>
</compile_context>

<pallas_src>
import jax
import jax.numpy as jnp
from jax.experimental import pallas as pl
from jax.experimental.pallas import tpu as pltpu

# Packed parameter layout, a single (16,) f32 SMEM array:
#   p[0:4]   = l0.weight[0, :]   (torch layout: out_features x in_features)
#   p[4:8]   = l0.weight[1, :]
#   p[8:10]  = l0.bias
#   p[10:12] = l1.weight[0, :]
#   p[12]    = l1.bias
#   p[13:16] = padding (zeros)
_N_PARAMS = 16


def _mlp_kernel(x_ref, p_ref, o_ref):
    # Everything is scalar-register math (no VPU/XLU/MXU, no DMA).
    x0 = x_ref[0]
    x1 = x_ref[1]
    x2 = x_ref[2]
    x3 = x_ref[3]

    # l0: h_j = sum_i w0[j, i] * x_i + b0[j]
    h0 = x0 * p_ref[0] + x1 * p_ref[1] + x2 * p_ref[2] + x3 * p_ref[3] + p_ref[8]
    h1 = x0 * p_ref[4] + x1 * p_ref[5] + x2 * p_ref[6] + x3 * p_ref[7] + p_ref[9]

    # ReLU (scalar compare + select)
    h0 = jnp.where(h0 > 0.0, h0, 0.0)
    h1 = jnp.where(h1 > 0.0, h1, 0.0)

    # l1: y = h0 * w1[0, 0] + h1 * w1[0, 1] + b1
    y = h0 * p_ref[10] + h1 * p_ref[11] + p_ref[12]

    o_ref[0] = y


_SMEM_SPEC = pl.BlockSpec(memory_space=pltpu.MemorySpace.SMEM)

_mlp_call = pl.pallas_call(
    _mlp_kernel,
    out_shape=jax.ShapeDtypeStruct((1,), jnp.float32),
    grid=(),
    in_specs=[_SMEM_SPEC, _SMEM_SPEC],
    out_specs=_SMEM_SPEC,
    cost_estimate=pl.CostEstimate(
        flops=21,
        transcendentals=0,
        bytes_accessed=4 * 4 + _N_PARAMS * 4 + 4,  # x + params + y
    ),
)


@jax.jit
def _mlp_forward(x_vec, params):
    """x_vec: (4,) float. params: pre-packed (16,) f32 device array."""
    return _mlp_call(x_vec.astype(jnp.float32), params)


class ControlFlowModuleJAX:
    """Deterministic re-implementation of the PyTorch ControlFlowModule."""

    def __init__(self, key):
        k0, k1, k2, k3 = jax.random.split(key, 4)
        # torch.nn.Linear stores weight as (out_features, in_features)
        lim0 = 1.0 / jnp.sqrt(4.0)
        lim1 = 1.0 / jnp.sqrt(2.0)
        self.w0 = jax.random.uniform(k0, (2, 4), jnp.float32, -lim0, lim0)
        self.b0 = jax.random.uniform(k1, (2,), jnp.float32, -lim0, lim0)
        self.w1 = jax.random.uniform(k2, (1, 2), jnp.float32, -lim1, lim1)
        self.b1 = jax.random.uniform(k3, (1,), jnp.float32, -lim1, lim1)

        # Pack all 13 parameters into one tiny SMEM-friendly vector ONCE.
        params = jnp.zeros((_N_PARAMS,), jnp.float32)
        params = params.at[0:4].set(self.w0[0, :])
        params = params.at[4:8].set(self.w0[1, :])
        params = params.at[8:10].set(self.b0)
        params = params.at[10:12].set(self.w1[0, :])
        params = params.at[12].set(self.b1[0])
        self._params = jax.device_put(params)

    def __call__(self, x):
        # Control flow on rank is static in JAX (known at trace time),
        # mirroring PyTorch's `if input.dim() > 1`.
        if x.ndim > 1:
            # TODO(synk): PyTorch returns a default int64 tensor; JAX defaults
            # to int32 unless x64 is enabled. Semantically still the scalar 0.
            return jnp.array(
                0, dtype=jnp.int64 if jax.config.jax_enable_x64 else jnp.int32
            )
        return _mlp_forward(x, self._params)


if __name__ == "__main__":
    key = jax.random.PRNGKey(0)
    kp, kx = jax.random.split(key)
    module = ControlFlowModuleJAX(kp)

    # 1-D input (hot path through the Pallas kernel)
    x1d = jax.random.normal(kx, (4,), jnp.float32)
    out = jax.block_until_ready(module(x1d))

    # reference check in plain JAX
    h = jnp.maximum(x1d @ module.w0.T + module.b0, 0.0)
    ref = h @ module.w1.T + module.b1
    assert out.shape == (1,), out.shape
    assert jnp.allclose(out, ref, atol=1e-5, rtol=1e-5), (out, ref)

    # 2-D input exercises the control-flow branch (returns scalar 0)
    x2d = jax.random.normal(kx, (2, 4), jnp.float32)
    out2 = jax.block_until_ready(module(x2d))
    assert int(out2) == 0

    print("KERNEL_OK")
</pallas_src>

<mosaic_0001>
module attributes {stable_mosaic.version = 11 : i64} {
  func.func @_mlp_kernel(%arg0: memref<4xf32, #tpu.memory_space<smem>>, %arg1: memref<16xf32, #tpu.memory_space<smem>>, %arg2: memref<1xf32, #tpu.memory_space<smem>>) attributes {dimension_semantics = [], scalar_prefetch = 0 : i64, scratch_operands = 0 : i64, tpu.core_type = #tpu.core_type<tc>} {
    %c0 = arith.constant 0 : index
    %0 = memref.load %arg0[%c0] : memref<4xf32, #tpu.memory_space<smem>>
    %c1 = arith.constant 1 : index
    %1 = memref.load %arg0[%c1] : memref<4xf32, #tpu.memory_space<smem>>
    %c2 = arith.constant 2 : index
    %2 = memref.load %arg0[%c2] : memref<4xf32, #tpu.memory_space<smem>>
    %c3 = arith.constant 3 : index
    %3 = memref.load %arg0[%c3] : memref<4xf32, #tpu.memory_space<smem>>
    %c0_0 = arith.constant 0 : index
    %4 = memref.load %arg1[%c0_0] : memref<16xf32, #tpu.memory_space<smem>>
    %5 = arith.mulf %0, %4 : f32
    %c1_1 = arith.constant 1 : index
    %6 = memref.load %arg1[%c1_1] : memref<16xf32, #tpu.memory_space<smem>>
    %7 = arith.mulf %1, %6 : f32
    %8 = arith.addf %5, %7 : f32
    %c2_2 = arith.constant 2 : index
    %9 = memref.load %arg1[%c2_2] : memref<16xf32, #tpu.memory_space<smem>>
    %10 = arith.mulf %2, %9 : f32
    %11 = arith.addf %8, %10 : f32
    %c3_3 = arith.constant 3 : index
    %12 = memref.load %arg1[%c3_3] : memref<16xf32, #tpu.memory_space<smem>>
    %13 = arith.mulf %3, %12 : f32
    %14 = arith.addf %11, %13 : f32
    %c8 = arith.constant 8 : index
    %15 = memref.load %arg1[%c8] : memref<16xf32, #tpu.memory_space<smem>>
    %16 = arith.addf %14, %15 : f32
    %c4 = arith.constant 4 : index
    %17 = memref.load %arg1[%c4] : memref<16xf32, #tpu.memory_space<smem>>
    %18 = arith.mulf %0, %17 : f32
    %c5 = arith.constant 5 : index
    %19 = memref.load %arg1[%c5] : memref<16xf32, #tpu.memory_space<smem>>
    %20 = arith.mulf %1, %19 : f32
    %21 = arith.addf %18, %20 : f32
    %c6 = arith.constant 6 : index
    %22 = memref.load %arg1[%c6] : memref<16xf32, #tpu.memory_space<smem>>
    %23 = arith.mulf %2, %22 : f32
    %24 = arith.addf %21, %23 : f32
    %c7 = arith.constant 7 : index
    %25 = memref.load %arg1[%c7] : memref<16xf32, #tpu.memory_space<smem>>
    %26 = arith.mulf %3, %25 : f32
    %27 = arith.addf %24, %26 : f32
    %c9 = arith.constant 9 : index
    %28 = memref.load %arg1[%c9] : memref<16xf32, #tpu.memory_space<smem>>
    %29 = arith.addf %27, %28 : f32
    %cst = arith.constant 0.000000e+00 : f32
    %30 = arith.cmpf ogt, %16, %cst : f32
    %cst_4 = arith.constant 0.000000e+00 : f32
    %31 = arith.select %30, %16, %cst_4 : f32
    %cst_5 = arith.constant 0.000000e+00 : f32
    %32 = arith.cmpf ogt, %29, %cst_5 : f32
    %cst_6 = arith.constant 0.000000e+00 : f32
    %33 = arith.select %32, %29, %cst_6 : f32
    %c10 = arith.constant 10 : index
    %34 = memref.load %arg1[%c10] : memref<16xf32, #tpu.memory_space<smem>>
    %35 = arith.mulf %31, %34 : f32
    %c11 = arith.constant 11 : index
    %36 = memref.load %arg1[%c11] : memref<16xf32, #tpu.memory_space<smem>>
    %37 = arith.mulf %33, %36 : f32
    %38 = arith.addf %35, %37 : f32
    %c12 = arith.constant 12 : index
    %39 = memref.load %arg1[%c12] : memref<16xf32, #tpu.memory_space<smem>>
    %40 = arith.addf %38, %39 : f32
    %c0_7 = arith.constant 0 : index
    %41 = memref.load %arg2[%c0_7] : memref<1xf32, #tpu.memory_space<smem>>
    memref.store %40, %arg2[%c0_7] : memref<1xf32, #tpu.memory_space<smem>>
    return
  }
}

</mosaic_0001>

<llo_original>
// kernel: _mlp_forward.1
$region0: #{_mlp_forward.1}
  #allocation0 [shape = 'u32[]', space=smem, size = 0x4, offset = 0x4, fixed_abs, tag = 'smem constant byte address 0x4 - core index']
  #allocation1 [shape = 'u32[144,128]{1,0:T(1,128)}', space=vmem, size = 0x12000, scoped, tag = 'internal scratch']
  %s0 = inlined_call_operand.hbm [shape: f32[4], index: 0, kind: input, shape index: {}]
  %s1 = inlined_call_operand.vmem [shape: f32[16], index: 1, kind: input, shape index: {}]
  %s2 = inlined_call_operand.hbm [shape: f32[1], index: 2, kind: output, shape index: {}]
  %s3 = sld [smem:[#allocation0]]
  $region26: #{_mlp_forward.1} parent=0
    _
  %s5 = ssub.s32 1, %s3
  %s6 = scalar_select 0, %s5, %s3
  $region1: #{_mlp_forward.1} parent=0
    #allocation2 [shape = 'u8[512]{0}', space=smem, size = 0x200, scoped, tag = 'input window, operand 0, single buffered']
    #allocation3 [shape = 's32[1]{0}', space=sflag, size = 0x4, scoped, tag = 'scoped memory for _mlp_forward.1']
    #allocation4 [shape = 's32[1]{0}', space=sflag, size = 0x4, scoped, tag = 'scoped memory for _mlp_forward.1']
    #allocation5 [shape = 's32[1]{0}', space=sflag, size = 0x4, scoped, tag = 'scoped memory for _mlp_forward.1']
    #allocation6 [shape = 'u8[512]{0}', space=smem, size = 0x200, scoped, tag = 'input window, operand 1, single buffered']
    #allocation7 [shape = 'u8[512]{0}', space=smem, size = 0x200, scoped, tag = 'output window, operand 0, single buffered']
    %7 = vsyncpa [#allocation3], 0
    %8 = vsyncpa [#allocation5], 0
    %9 = vsyncpa [#allocation4], 0
    // Predicated region
    $region2: #{_mlp_forward.1} parent=1 // pred_check
      _
    $region3: #{_mlp_forward.1} parent=1 // pred_check_branch
      %11 = sbr.rel (0) target = $region5
    $region4: #{_mlp_forward.1} parent=1 // pred_region
      %s13 = ssub.s32 16, 16
      %14 = vsyncadd [#allocation3], %s13
      %17 = dma.hbm_to_smem %s0, 16, [#allocation2], [#allocation3]
    $region5: #{_mlp_forward.1} parent=1 // pred_fallthru
      _
    // Predicated region
    $region6: #{_mlp_forward.1} parent=1 // pred_check
      _
    $region7: #{_mlp_forward.1} parent=1 // pred_check_branch
      %19 = sbr.rel (0) target = $region9
    $region8: #{_mlp_forward.1} parent=1 // pred_region
      %s21 = ssub.s32 16, 16
      %22 = vsyncadd [#allocation5], %s21
      %s24 = sshll.u32 %s1, 4
      %s25 = int_to_ptr.vmem [resolvable:$true] %s24
      %27 = dma.vmem_to_smem %s25, 16, [#allocation6], [#allocation5]
    $region9: #{_mlp_forward.1} parent=1 // pred_fallthru
      _
    // Predicated region
    $region10: #{_mlp_forward.1} parent=1 // pred_check
      _
    $region11: #{_mlp_forward.1} parent=1 // pred_check_branch
      %29 = sbr.rel (0) target = $region13
    $region12: #{_mlp_forward.1} parent=1 // pred_region
      %30 = dma.done [#allocation3], 16
    $region13: #{_mlp_forward.1} parent=1 // pred_fallthru
      _
    // Predicated region
    $region14: #{_mlp_forward.1} parent=1 // pred_check
      _
    $region15: #{_mlp_forward.1} parent=1 // pred_check_branch
      %32 = sbr.rel (0) target = $region17
    $region16: #{_mlp_forward.1} parent=1 // pred_region
      %33 = dma.done [#allocation5], 16
    $region17: #{_mlp_forward.1} parent=1 // pred_fallthru
      _
    %34 = sfence
    %s35 = sld [smem:[#allocation2]]
    %s36 = sld [smem:[#allocation2 + $0x1]]
    %s37 = sld [smem:[#allocation2 + $0x2]]
    %s38 = sld [smem:[#allocation2 + $0x3]]
    %s39 = sld [smem:[#allocation6]]
    %s40 = smul.f32 %s35, %s39
    %s41 = sld [smem:[#allocation6 + $0x1]]
    %s42 = smul.f32 %s36, %s41
    %s43 = sadd.f32 %s40, %s42
    %s44 = sld [smem:[#allocation6 + $0x2]]
    %s45 = smul.f32 %s37, %s44
    %s46 = sadd.f32 %s43, %s45
    %s47 = sld [smem:[#allocation6 + $0x3]]
    %s48 = smul.f32 %s38, %s47
    %s49 = sadd.f32 %s46, %s48
    %s50 = sld [smem:[#allocation6 + $0x8]]
    %s51 = sadd.f32 %s49, %s50
    %s52 = sld [smem:[#allocation6 + $0x4]]
    %s53 = smul.f32 %s35, %s52
    %s54 = sld [smem:[#allocation6 + $0x5]]
    %s55 = smul.f32 %s36, %s54
    %s56 = sadd.f32 %s53, %s55
    %s57 = sld [smem:[#allocation6 + $0x6]]
    %s58 = smul.f32 %s37, %s57
    %s59 = sadd.f32 %s56, %s58
    %s60 = sld [smem:[#allocation6 + $0x7]]
    %s61 = smul.f32 %s38, %s60
    %s62 = sadd.f32 %s59, %s61
    %s63 = sld [smem:[#allocation6 + $0x9]]
    %s64 = sadd.f32 %s62, %s63
    %p65 = scmp.gt.f32.partialorder %s51, 0.0
    %s66 = scalar_select %p65, %s51, 0.0
    %p67 = scmp.gt.f32.partialorder %s64, 0.0
    %s68 = scalar_select %p67, %s64, 0.0
    %s69 = sld [smem:[#allocation6 + $0xa]]
    %s70 = smul.f32 %s66, %s69
    %s71 = sld [smem:[#allocation6 + $0xb]]
    %s72 = smul.f32 %s68, %s71
    %s73 = sadd.f32 %s70, %s72
    %s74 = sld [smem:[#allocation6 + $0xc]]
    %s75 = sadd.f32 %s73, %s74
    %s76 = scalar_lea.smem [#allocation7], 0
    %77 = sst [smem:[%s76]] %s75
    // Predicated region
    $region18: #{_mlp_forward.1} parent=1 // pred_check
      _
    $region19: #{_mlp_forward.1} parent=1 // pred_check_branch
      %79 = sbr.rel (0) target = $region21
    $region20: #{_mlp_forward.1} parent=1 // pred_region
      %s81 = ssub.s32 16, 16
      %82 = vsyncadd [#allocation4], %s81
      %85 = dma.smem_to_hbm [#allocation7], 16, %s2, [#allocation4]
    $region21: #{_mlp_forward.1} parent=1 // pred_fallthru
      _
    // Predicated region
    $region22: #{_mlp_forward.1} parent=1 // pred_check
      _
    $region23: #{_mlp_forward.1} parent=1 // pred_check_branch
      %87 = sbr.rel (0) target = $region25
    $region24: #{_mlp_forward.1} parent=1 // pred_region
      %88 = dma.done [#allocation4], 16
    $region25: #{_mlp_forward.1} parent=1 // pred_fallthru
      _
    %89 = sfence
    %90 = vsyncpa [#allocation3], 1
    %91 = vsyncpa [#allocation4], 1
    %92 = vsyncpa [#allocation5], 1

</llo_original>
